<compile_context>
chip_gen: v5e
topology: v5e:2x2
jax: 0.10.0
libtpu: 0.0.40
codegen_flags: <defaults>
</compile_context>

<pallas_src>
import functools
import math

import jax
import jax.numpy as jnp
from jax.experimental import pallas as pl
from jax.experimental.pallas import tpu as pltpu

_LANE = 128
_TARGET_BLOCK_BYTES = 4 * 1024 * 1024   # ~4 MiB of input per grid step


def _cdiv(a, b):
    return -(-a // b)


def _laplace_kernel(x_ref, o_ref, acc_ref, *, mu, neg_inv_scale, const_term,
                    bn, ncols, need_col_mask):
    """Accumulate per-row sum(|x - mu|) over the N axis; finalize to log-prob sum."""
    k = pl.program_id(1)

    @pl.when(k == 0)
    def _():
        acc_ref[...] = jnp.zeros_like(acc_ref)

    x = x_ref[...].astype(jnp.float32)           # upcast in VPU; HBM stays native
    a = jnp.abs(x - mu)
    if need_col_mask:
        # Zero the ragged tail of the last column block (replaces wrapper pad).
        col = k * bn + jax.lax.broadcasted_iota(jnp.int32, a.shape, 1)
        a = jnp.where(col < ncols, a, 0.0)
    # Narrow (bB, 1) accumulator: one partial reduce per step (XLU is idle here).
    acc_ref[...] += jnp.sum(a, axis=-1, keepdims=True)

    @pl.when(k == pl.num_programs(1) - 1)
    def _():
        o_ref[...] = acc_ref[...] * neg_inv_scale + const_term


def laplace_forward(x, mu=0.5, scale=1.25):
    """Equivalent of Laplace(mu, std).forward(x) for scalar mu/std."""
    mu = float(mu)
    scale = float(scale)

    B = x.shape[0]
    xf = x.reshape(B, -1)                        # metadata reshape, native dtype
    N = xf.shape[1]
    itemsize = jnp.dtype(xf.dtype).itemsize
    pack = max(1, 4 // itemsize)                 # rows packed per 32-bit sublane
    sub = 8 * pack                               # row-block alignment

    # --- optional row split: expose >= 2 "parallel" row blocks (v7x megacore) ---
    P = 1
    if B < 2 * sub and B * N * itemsize >= (8 << 20):
        for cand in (2, 4, 8, 16, 32):
            if B * cand >= 2 * sub and N % cand == 0 and (N // cand) >= 512:
                P = cand
                break
        # TODO(synk): if N has no suitable divisor, a column-partitioned parallel
        # grid axis would still feed both v7x TensorCores; not implemented.
    work = xf.reshape(B * P, N // P) if P > 1 else xf
    R, M = work.shape
    row_bytes = M * itemsize

    # --- row tile ------------------------------------------------------------
    if R <= sub:
        bB = R                                   # full dim (always legal)
    else:
        want_rows = max(1, _TARGET_BLOCK_BYTES // max(row_bytes, 1))
        bB = max(sub, (min(want_rows, R) // sub) * sub)
        cap = ((R - 1) // sub) * sub             # keep >= 2 row blocks if possible
        if cap >= sub:
            bB = min(bB, cap)

    # --- column tile (reduction axis, last in grid) ---------------------------
    if bB * row_bytes <= 2 * _TARGET_BLOCK_BYTES or M <= 2 * _LANE:
        bN = M                                   # whole row per block, K == 1
    else:
        cols = max(_LANE, _TARGET_BLOCK_BYTES // (bB * itemsize))
        bN = max(_LANE, min((cols // _LANE) * _LANE, (M // _LANE) * _LANE))
    K = _cdiv(M, bN)
    need_col_mask = (K * bN != M)

    kernel = functools.partial(
        _laplace_kernel,
        mu=mu,
        neg_inv_scale=-1.0 / scale,
        const_term=-float(M) * math.log(2.0 * scale),   # per work-row constant
        bn=bN,
        ncols=M,
        need_col_mask=need_col_mask,
    )

    block_bytes = bB * bN * itemsize
    vmem_limit = int(min(48 << 20, max(32 << 20, 2 * block_bytes + (4 << 20))))

    out = pl.pallas_call(
        kernel,
        out_shape=jax.ShapeDtypeStruct((R, 1), jnp.float32),
        grid_spec=pltpu.PrefetchScalarGridSpec(
            num_scalar_prefetch=0,
            grid=(_cdiv(R, bB), K),              # reduction axis last
            in_specs=[pl.BlockSpec((bB, bN), lambda i, k: (i, k))],
            out_specs=pl.BlockSpec((bB, 1), lambda i, k: (i, 0)),
            scratch_shapes=[pltpu.VMEM((bB, 1), jnp.float32)],
        ),
        compiler_params=pltpu.CompilerParams(
            dimension_semantics=("parallel", "arbitrary"),
            vmem_limit_bytes=vmem_limit,
        ),
        cost_estimate=pl.CostEstimate(
            flops=3 * R * M,
            transcendentals=0,
            bytes_accessed=R * M * itemsize + R * 4,
        ),
    )(work)

    if P > 1:
        return jnp.sum(out.reshape(B, P), axis=1)
    return out[:, 0]


if __name__ == "__main__":
    # Deterministic "parameters" of the distribution (module __init__ args).
    MU = 0.5
    SCALE = 1.25

    key = jax.random.PRNGKey(0)
    x = jax.random.normal(key, (2, 4, 16, 16), dtype=jnp.float32)  # NCHW

    y = laplace_forward(x, MU, SCALE)
    y = jax.block_until_ready(y)

    # Reference check in plain JAX.
    ref = jnp.sum(
        (-jnp.log(2.0 * SCALE) - jnp.abs(x - MU) / SCALE).reshape(x.shape[0], -1),
        axis=1,
    )
    assert y.shape == (x.shape[0],)
    assert jnp.allclose(y, ref, rtol=1e-5, atol=1e-3), (y, ref)

    print("KERNEL_OK")
</pallas_src>

<mosaic_0001>
module attributes {stable_mosaic.version = 11 : i64} {
  func.func @_laplace_kernel(%arg0: i32, %arg1: i32, %arg2: memref<2x1024xf32, #tpu.memory_space<vmem>>, %arg3: memref<2x1xf32, #tpu.memory_space<vmem>>, %arg4: memref<2x1xf32, #tpu.memory_space<vmem>>) attributes {dimension_semantics = [#tpu.dimension_semantics<parallel>, #tpu.dimension_semantics<arbitrary>], iteration_bounds = array<i64: 1, 1>, scalar_prefetch = 0 : i64, scratch_operands = 1 : i64, tpu.core_type = #tpu.core_type<tc>, window_params = [{transform_indices = @transform_0, window_bounds = array<i64: 2, 1024>}, {transform_indices = @transform_1, window_bounds = array<i64: 2, 1>}]} {
    %c0_i32 = arith.constant 0 : i32
    %0 = arith.cmpi eq, %arg1, %c0_i32 : i32
    %1 = arith.extui %0 : i1 to i32
    %c0_i32_0 = arith.constant 0 : i32
    %2 = arith.cmpi ne, %1, %c0_i32_0 : i32
    scf.if %2 {
      %cst_9 = arith.constant 0.000000e+00 : f32
      %15 = vector.broadcast %cst_9 : f32 to vector<2x1xf32>
      %c0_10 = arith.constant 0 : index
      %c0_11 = arith.constant 0 : index
      %16 = vector.load %arg4[%c0_10, %c0_11] : memref<2x1xf32, #tpu.memory_space<vmem>>, vector<2x1xf32>
      tpu.vector_store %arg4[%c0_10, %c0_11], %15 {strides = array<i32>} : memref<2x1xf32, #tpu.memory_space<vmem>>, vector<2x1xf32>,
    } else {
    }
    %c0 = arith.constant 0 : index
    %c0_1 = arith.constant 0 : index
    %3 = vector.load %arg2[%c0, %c0_1] : memref<2x1024xf32, #tpu.memory_space<vmem>>, vector<2x1024xf32>
    %cst = arith.constant 5.000000e-01 : f32
    %4 = vector.broadcast %cst : f32 to vector<2x1024xf32>
    %5 = arith.subf %3, %4 : vector<2x1024xf32>
    %6 = math.absf %5 : vector<2x1024xf32>
    %c0_2 = arith.constant 0 : index
    %c0_3 = arith.constant 0 : index
    %7 = vector.load %arg4[%c0_2, %c0_3] : memref<2x1xf32, #tpu.memory_space<vmem>>, vector<2x1xf32>
    %cst_4 = arith.constant dense<0.000000e+00> : vector<2xf32>
    %8 = vector.multi_reduction <add>, %6, %cst_4 [1] : vector<2x1024xf32> to vector<2xf32>
    %9 = vector.shape_cast %8 : vector<2xf32> to vector<2x1xf32>
    %10 = arith.addf %7, %9 : vector<2x1xf32>
    %c0_5 = arith.constant 0 : index
    %c0_6 = arith.constant 0 : index
    %11 = vector.load %arg4[%c0_5, %c0_6] : memref<2x1xf32, #tpu.memory_space<vmem>>, vector<2x1xf32>
    tpu.vector_store %arg4[%c0_5, %c0_6], %10 {strides = array<i32>} : memref<2x1xf32, #tpu.memory_space<vmem>>, vector<2x1xf32>,
    %c0_i32_7 = arith.constant 0 : i32
    %12 = arith.cmpi eq, %arg1, %c0_i32_7 : i32
    %13 = arith.extui %12 : i1 to i32
    %c0_i32_8 = arith.constant 0 : i32
    %14 = arith.cmpi ne, %13, %c0_i32_8 : i32
    scf.if %14 {
      %c0_9 = arith.constant 0 : index
      %c0_10 = arith.constant 0 : index
      %15 = vector.load %arg4[%c0_9, %c0_10] : memref<2x1xf32, #tpu.memory_space<vmem>>, vector<2x1xf32>
      %cst_11 = arith.constant -8.000000e-01 : f32
      %16 = vector.broadcast %cst_11 : f32 to vector<2x1xf32>
      %17 = arith.mulf %15, %16 : vector<2x1xf32>
      %cst_12 = arith.constant -938.281738 : f32
      %18 = vector.broadcast %cst_12 : f32 to vector<2x1xf32>
      %19 = arith.addf %17, %18 : vector<2x1xf32>
      %c0_13 = arith.constant 0 : index
      %c0_14 = arith.constant 0 : index
      %20 = vector.load %arg3[%c0_13, %c0_14] : memref<2x1xf32, #tpu.memory_space<vmem>>, vector<2x1xf32>
      tpu.vector_store %arg3[%c0_13, %c0_14], %19 {strides = array<i32>} : memref<2x1xf32, #tpu.memory_space<vmem>>, vector<2x1xf32>,
    } else {
    }
    return
  }
  func.func @transform_0(%arg0: i32, %arg1: i32) -> (i32, i32) {
    %c0_i32 = arith.constant 0 : i32
    return %arg0, %arg1 : i32, i32
  }
  func.func @transform_1(%arg0: i32, %arg1: i32) -> (i32, i32) {
    %c0_i32 = arith.constant 0 : i32
    %c0_i32_0 = arith.constant 0 : i32
    return %arg0, %c0_i32 : i32, i32
  }
}

</mosaic_0001>

<llo_original>
// kernel: tpu_custom_call.1
$region0: #{tpu_custom_call.1}
  #allocation0 [shape = 'u32[]', space=smem, size = 0x4, offset = 0x4, fixed_abs, tag = 'smem constant byte address 0x4 - core index']
  #allocation1 [shape = 'u32[72,128]{1,0:T(1,128)}', space=vmem, size = 0x9000, scoped, tag = 'internal scratch']
  #allocation2 [shape = 'f32[2,1]{1,0:T(2,128)}', space=vmem, size = 0x400, scoped, tag = 'scratch operand']
  %s0 = inlined_call_operand.hbm [shape: f32[2,1024], index: 0, kind: input, shape index: {}]
  %s1 = inlined_call_operand.vmem [shape: f32[2,1], index: 1, kind: output, shape index: {}]
  %s2 = sld [smem:[#allocation0]]
  $region26: #{tpu_custom_call.1} parent=0
    _
  %s4 = ssub.s32 1, %s2
  %s5 = scalar_select 0, %s4, %s2
  $region1: #{tpu_custom_call.1} parent=0
    #allocation3 [shape = 'u8[8192]{0}', space=vmem, size = 0x2000, scoped, tag = 'input window, operand 0, single buffered']
    #allocation4 [shape = 's32[1]{0}', space=sflag, size = 0x4, scoped, tag = 'scoped memory for tpu_custom_call.1']
    %6 = vsyncpa [#allocation4], 0
    // Predicated region
    $region2: #{tpu_custom_call.1} parent=1 // pred_check
      _
    $region3: #{tpu_custom_call.1} parent=1 // pred_check_branch
      %8 = sbr.rel (0) target = $region5
    $region4: #{tpu_custom_call.1} parent=1 // pred_region
      %10 = vsyncadd [#allocation4], 0
      %s12 = sshll.u32 %s0, 4
      %s13 = int_to_ptr.hbm [resolvable:$true] %s12
      %s14 = sshll.u32 [#allocation3], 4
      %s15 = int_to_ptr.vmem [resolvable:$true] %s14
      %17 = dma.hbm_to_vmem [thread:$0]  %s13, 256, %s15, [#allocation4]
    $region5: #{tpu_custom_call.1} parent=1 // pred_fallthru
      _
    // Predicated region
    $region6: #{tpu_custom_call.1} parent=1 // pred_check
      _
    $region7: #{tpu_custom_call.1} parent=1 // pred_check_branch
      %19 = sbr.rel (0) target = $region9
    $region8: #{tpu_custom_call.1} parent=1 // pred_region
      %21 = dma.done [#allocation4], 256
    $region9: #{tpu_custom_call.1} parent=1 // pred_fallthru
      _
    %p22 = scmp.eq.s32.totalorder 0, 0
    // Predicated region
    $region10: #{tpu_custom_call.1} parent=1 // pred_check
      %p23 = pneg %p22
    $region11: #{tpu_custom_call.1} parent=1 // pred_check_branch
      %25 = sbr.rel (%p23) target = $region13
    $region12: #{tpu_custom_call.1} parent=1 // pred_region
      %vm26 = vcmask 1024
      %27 = vst.msk [vmem:[#allocation2] sm:$0x3] %vm26, 0.0
    $region13: #{tpu_custom_call.1} parent=1 // pred_fallthru
      _
    %v28 = vld [vmem:[#allocation3] sm:$0xff]
    %v29 = vld [vmem:[#allocation3 + $0x8] sm:$0xff]
    %v30 = vsub.f32 %v28, 0.5
    %v31 = vsub.f32 %v29, 0.5
    %v32 = vand.u32 2147483647, %v30
    %v33 = vand.u32 2147483647, %v31
    %v34 = vld [vmem:[#allocation2] sm:$0x3]
    %37 = vst [vmem:[#allocation1] ss:$4 sm:$0xff] %v32
    %s38 = scalar_lea.vmem [#allocation1], 32
    %39 = vst [vmem:[%s38] ss:$4 sm:$0xff] %v33
    %v40 = vld.sshfl [vmem:[#allocation1] sm:$0xff pattern:$0x73625140]
    %v41 = vld.sshfl [vmem:[#allocation1 + $0x8] sm:$0xff pattern:$0x73625140]
    %v42 = vld.sshfl [vmem:[#allocation1 + $0x10] sm:$0xff pattern:$0x73625140]
    %v43 = vld.sshfl [vmem:[#allocation1 + $0x18] sm:$0xff pattern:$0x73625140]
    %v44 = vld.sshfl [vmem:[#allocation1 + $0x20] sm:$0xff pattern:$0x73625140]
    %v45 = vld.sshfl [vmem:[#allocation1 + $0x28] sm:$0xff pattern:$0x73625140]
    %v46 = vld.sshfl [vmem:[#allocation1 + $0x30] sm:$0xff pattern:$0x73625140]
    %v47 = vld.sshfl [vmem:[#allocation1 + $0x38] sm:$0xff pattern:$0x73625140]
    %vm56 = vcmask 1041408
    %v57 = vsel %vm56, %v40, 0.0
    %v58 = vsel %vm56, %v41, 0.0
    %v59 = vadd.f32 %v57, %v58
    %v60 = vsel %vm56, %v42, 0.0
    %v61 = vadd.f32 %v59, %v60
    %v62 = vsel %vm56, %v43, 0.0
    %v63 = vadd.f32 %v61, %v62
    %v64 = vsel %vm56, %v44, 0.0
    %v65 = vadd.f32 %v63, %v64
    %v66 = vsel %vm56, %v45, 0.0
    %v67 = vadd.f32 %v65, %v66
    %v68 = vsel %vm56, %v46, 0.0
    %v69 = vadd.f32 %v67, %v68
    %v70 = vsel %vm56, %v47, 0.0
    %v71 = vadd.f32 %v69, %v70
    %72 = vadd.xlane.f32.xlu0 %v71
    %v73 = vpop.xlane.xlu0 %72
    %v74 = vadd.f32 %v34, %v73
    %vm75 = vcmask 1024
    %76 = vst.msk [vmem:[#allocation2] sm:$0x3] %vm75, %v74
    // Predicated region
    $region14: #{tpu_custom_call.1} parent=1 // pred_check
      %p77 = pneg %p22
    $region15: #{tpu_custom_call.1} parent=1 // pred_check_branch
      %79 = sbr.rel (%p77) target = $region17
    $region16: #{tpu_custom_call.1} parent=1 // pred_region
      %v80 = vld [vmem:[#allocation2] sm:$0x3]
      %v81 = vmul.f32 %v80, -0.8
      %v82 = vadd.f32 %v81, -938.28174
      %83 = vst.msk [vmem:[%s1] sm:$0x3] %vm75, %v82
    $region17: #{tpu_custom_call.1} parent=1 // pred_fallthru
      _
    // Predicated region
    $region18: #{tpu_custom_call.1} parent=1 // pred_check
      _
    $region19: #{tpu_custom_call.1} parent=1 // pred_check_branch
      %85 = sbr.rel (0) target = $region21
    $region20: #{tpu_custom_call.1} parent=1 // pred_region
      _
    $region21: #{tpu_custom_call.1} parent=1 // pred_fallthru
      _
    // Predicated region
    $region22: #{tpu_custom_call.1} parent=1 // pred_check
      _
    $region23: #{tpu_custom_call.1} parent=1 // pred_check_branch
      %87 = sbr.rel (0) target = $region25
    $region24: #{tpu_custom_call.1} parent=1 // pred_region
      _
    $region25: #{tpu_custom_call.1} parent=1 // pred_fallthru
      _
    %88 = vsyncpa [#allocation4], 1

</llo_original>
